<compile_context>
chip_gen: v6e
topology: v6e:2x2x1
jax: 0.10.0
libtpu: 0.0.40
codegen_flags: <defaults>
</compile_context>

<pallas_src>
import functools

import jax
import jax.numpy as jnp
from jax.experimental import pallas as pl
from jax.experimental.pallas import tpu as pltpu


def _policy_kernel(xt_ref, w1_ref, w2_ref, bias_ref, out_ref, *, state_dim, hidden, vpu_fc1):
    """One batch tile, batch-in-lanes.

    xt_ref:   (D, TILE_B)  transposed input tile (batch on the lane axis)
    w1_ref:   (H, D)       fc1 weight, PyTorch (out, in) layout, VMEM-resident
    w2_ref:   (A, H)       fc2 weight, VMEM-resident
    bias_ref: (H + A, 1)   [b1; b2], VMEM-resident
    out_ref:  (A, TILE_B)  action probabilities (transposed)
    """
    xt = xt_ref[...]                                  # (D, TB) f32
    b1 = bias_ref[0:hidden, :]                        # (H, 1) -> broadcasts across lanes
    b2 = bias_ref[hidden:, :]                         # (A, 1)

    if vpu_fc1:
        # D is tiny: D unrolled outer-product FMAs on the VPU into a dense (H, TB)
        # accumulator; the bias rides along in the first FMA.  Keeps the MXU free for fc2.
        w1 = w1_ref[...]                              # (H, D)
        h = w1[:, 0:1] * xt[0:1, :] + b1              # (H, TB)
        for k in range(1, state_dim):                 # static, unrolled
            h = h + w1[:, k:k + 1] * xt[k:k + 1, :]
    else:
        h = jnp.dot(w1_ref[...], xt, preferred_element_type=jnp.float32) + b1
    h = jnp.maximum(h, 0.0)                           # ReLU

    # fc2 on the MXU: (A, H) @ (H, TB) -> lane-dense (A, TB) logits.
    logits = jnp.dot(w2_ref[...], h, preferred_element_type=jnp.float32) + b2

    # Numerically stable softmax over the action (sublane) axis.  Exact divide so rows sum
    # to 1 exactly enough for samplers / policy-gradient log-probs.
    m = jnp.max(logits, axis=0, keepdims=True)        # (1, TB)
    e = jnp.exp(logits - m)                           # dense EUP work
    denom = jnp.sum(e, axis=0, keepdims=True)         # (1, TB)
    out_ref[...] = (e / denom).astype(out_ref.dtype)  # unmasked, lane-dense store


def _round_up(n, m):
    return ((n + m - 1) // m) * m


def policy_forward(x, w1, b1, w2, b2, *, max_tile_b=1024):
    """Pallas equivalent of Policy.forward.

    x:  (B, state_dim) or (state_dim,)
    w1: (hidden, state_dim), b1: (hidden,)      -- PyTorch nn.Linear layout
    w2: (n_actions, hidden), b2: (n_actions,)
    returns (B, n_actions) action probabilities.
    """
    if x.ndim == 1:
        x = x[None, :]                                # unsqueeze(0)
    B = x.shape[0]
    x = x.reshape(B, -1).astype(jnp.float32)          # x.view(B, -1)

    H, D = w1.shape
    A, H2 = w2.shape
    assert H2 == H and x.shape[1] == D

    # Batch tiling (batch lives in the lane dim): one tile for small/medium batches
    # (grid=1, no per-step pipeline overhead on single-TC v5e/v6e), otherwise an even
    # number of <= max_tile_b-lane tiles so v7x's two TensorCores split evenly.
    if B <= max_tile_b:
        n_tiles = 1
        tile_b = _round_up(B, 128)
    else:
        n_tiles = 2 * pl.cdiv(B, 2 * max_tile_b)
        tile_b = _round_up(pl.cdiv(B, n_tiles), 128)
    padded_b = n_tiles * tile_b

    # Batch-in-lanes input: (D, padded_B); zero-pad the ragged tail (rows are independent
    # through softmax and sliced off below).
    xt = x.T
    if padded_b != B:
        xt = jnp.pad(xt, ((0, 0), (0, padded_b - B)))

    # Fuse both biases into one small resident buffer.
    bias = jnp.concatenate(
        [b1.reshape(-1), b2.reshape(-1)]).astype(jnp.float32).reshape(H + A, 1)

    kernel = functools.partial(
        _policy_kernel, state_dim=D, hidden=H, vpu_fc1=(D <= 8))

    out_t = pl.pallas_call(
        kernel,
        out_shape=jax.ShapeDtypeStruct((A, padded_b), jnp.float32),
        grid=(n_tiles,),
        in_specs=[
            pl.BlockSpec((D, tile_b), lambda i: (0, i)),        # x^T : streamed per tile
            pl.BlockSpec((H, D), lambda i: (0, 0)),             # w1  : resident
            pl.BlockSpec((A, H), lambda i: (0, 0)),             # w2  : resident
            pl.BlockSpec((H + A, 1), lambda i: (0, 0)),         # [b1;b2] : resident
        ],
        out_specs=pl.BlockSpec((A, tile_b), lambda i: (0, i)),  # lane-dense stores
        compiler_params=pltpu.CompilerParams(
            dimension_semantics=("parallel",),                  # batch tiles across TCs
        ),
    )(xt, w1.astype(jnp.float32), w2.astype(jnp.float32), bias)

    return out_t[:, :B].T                                       # (B, A)


def init_params(key, state_dim, hidden_size, n_actions):
    """nn.Linear-style init (uniform +/- 1/sqrt(fan_in)), PyTorch (out, in) layout."""
    k1, k2, k3, k4 = jax.random.split(key, 4)
    bound1 = 1.0 / jnp.sqrt(jnp.float32(state_dim))
    bound2 = 1.0 / jnp.sqrt(jnp.float32(hidden_size))
    w1 = jax.random.uniform(k1, (hidden_size, state_dim), jnp.float32, -bound1, bound1)
    b1 = jax.random.uniform(k2, (hidden_size,), jnp.float32, -bound1, bound1)
    w2 = jax.random.uniform(k3, (n_actions, hidden_size), jnp.float32, -bound2, bound2)
    b2 = jax.random.uniform(k4, (n_actions,), jnp.float32, -bound2, bound2)
    return w1, b1, w2, b2


if __name__ == "__main__":
    # Small shapes consistent with the module: Box(4,) state space, Discrete(8) actions,
    # hidden_size=32, batch=2.
    batch, state_dim, hidden_size, n_actions = 2, 4, 32, 8

    key = jax.random.PRNGKey(0)
    k_x, k_p, k_big = jax.random.split(key, 3)
    x = jax.random.normal(k_x, (batch, state_dim), jnp.float32)
    w1, b1, w2, b2 = init_params(k_p, state_dim, hidden_size, n_actions)

    def ref_fn(xx):
        h = jnp.maximum(xx @ w1.T + b1, 0.0)
        return jax.nn.softmax(h @ w2.T + b2, axis=-1)

    # Tiny per-step inference batch (grid = 1 tile).
    probs = policy_forward(x, w1, b1, w2, b2)
    jax.block_until_ready(probs)
    assert probs.shape == (batch, n_actions)
    assert jnp.allclose(probs, ref_fn(x), atol=1e-5), "mismatch vs reference (small batch)"
    assert jnp.allclose(jnp.sum(probs, axis=-1), 1.0, atol=1e-5)

    # Rollout-style batch: exercises the 2-tile path + ragged (zero-padded) lanes.
    big_b = 1500
    xb = jax.random.normal(k_big, (big_b, state_dim), jnp.float32)
    probs_b = policy_forward(xb, w1, b1, w2, b2)
    jax.block_until_ready(probs_b)
    assert probs_b.shape == (big_b, n_actions)
    assert jnp.allclose(probs_b, ref_fn(xb), atol=1e-5), "mismatch vs reference (big batch)"
    assert jnp.allclose(jnp.sum(probs_b, axis=-1), 1.0, atol=1e-5)

    print("KERNEL_OK")
</pallas_src>

<mosaic_0001>
module attributes {stable_mosaic.version = 11 : i64} {
  func.func @_policy_kernel(%arg0: i32, %arg1: memref<4x128xf32, #tpu.memory_space<vmem>>, %arg2: memref<32x4xf32, #tpu.memory_space<vmem>>, %arg3: memref<8x32xf32, #tpu.memory_space<vmem>>, %arg4: memref<40x1xf32, #tpu.memory_space<vmem>>, %arg5: memref<8x128xf32, #tpu.memory_space<vmem>>) attributes {dimension_semantics = [#tpu.dimension_semantics<parallel>], iteration_bounds = array<i64: 1>, scalar_prefetch = 0 : i64, scratch_operands = 0 : i64, tpu.core_type = #tpu.core_type<tc>, window_params = [{transform_indices = @transform_0, window_bounds = array<i64: 4, 128>}, {pipeline_mode = #tpu.pipeline_mode<synchronous>, transform_indices = @transform_1, window_bounds = array<i64: 32, 4>}, {pipeline_mode = #tpu.pipeline_mode<synchronous>, transform_indices = @transform_2, window_bounds = array<i64: 8, 32>}, {pipeline_mode = #tpu.pipeline_mode<synchronous>, transform_indices = @transform_3, window_bounds = array<i64: 40, 1>}, {transform_indices = @transform_4, window_bounds = array<i64: 8, 128>}]} {
    %c0 = arith.constant 0 : index
    %c0_0 = arith.constant 0 : index
    %0 = vector.load %arg1[%c0, %c0_0] : memref<4x128xf32, #tpu.memory_space<vmem>>, vector<4x128xf32>
    %c0_1 = arith.constant 0 : index
    %c0_2 = arith.constant 0 : index
    %1 = vector.load %arg4[%c0_1, %c0_2] : memref<40x1xf32, #tpu.memory_space<vmem>>, vector<32x1xf32>
    %c32 = arith.constant 32 : index
    %c0_3 = arith.constant 0 : index
    %2 = vector.load %arg4[%c32, %c0_3] : memref<40x1xf32, #tpu.memory_space<vmem>>, vector<8x1xf32>
    %c0_4 = arith.constant 0 : index
    %c0_5 = arith.constant 0 : index
    %3 = vector.load %arg2[%c0_4, %c0_5] : memref<32x4xf32, #tpu.memory_space<vmem>>, vector<32x4xf32>
    %4 = vector.extract_strided_slice %3 {offsets = [0, 0], sizes = [32, 1], strides = [1, 1]} : vector<32x4xf32> to vector<32x1xf32>
    %5 = vector.extract_strided_slice %0 {offsets = [0, 0], sizes = [1, 128], strides = [1, 1]} : vector<4x128xf32> to vector<1x128xf32>
    %6 = vector.broadcast %4 : vector<32x1xf32> to vector<32x128xf32>
    %7 = vector.broadcast %5 : vector<1x128xf32> to vector<32x128xf32>
    %8 = arith.mulf %6, %7 : vector<32x128xf32>
    %9 = vector.broadcast %1 : vector<32x1xf32> to vector<32x128xf32>
    %10 = arith.addf %8, %9 : vector<32x128xf32>
    %11 = vector.extract_strided_slice %3 {offsets = [0, 1], sizes = [32, 1], strides = [1, 1]} : vector<32x4xf32> to vector<32x1xf32>
    %12 = vector.extract_strided_slice %0 {offsets = [1, 0], sizes = [1, 128], strides = [1, 1]} : vector<4x128xf32> to vector<1x128xf32>
    %13 = vector.broadcast %11 : vector<32x1xf32> to vector<32x128xf32>
    %14 = vector.broadcast %12 : vector<1x128xf32> to vector<32x128xf32>
    %15 = arith.mulf %13, %14 : vector<32x128xf32>
    %16 = arith.addf %10, %15 : vector<32x128xf32>
    %17 = vector.extract_strided_slice %3 {offsets = [0, 2], sizes = [32, 1], strides = [1, 1]} : vector<32x4xf32> to vector<32x1xf32>
    %18 = vector.extract_strided_slice %0 {offsets = [2, 0], sizes = [1, 128], strides = [1, 1]} : vector<4x128xf32> to vector<1x128xf32>
    %19 = vector.broadcast %17 : vector<32x1xf32> to vector<32x128xf32>
    %20 = vector.broadcast %18 : vector<1x128xf32> to vector<32x128xf32>
    %21 = arith.mulf %19, %20 : vector<32x128xf32>
    %22 = arith.addf %16, %21 : vector<32x128xf32>
    %23 = vector.extract_strided_slice %3 {offsets = [0, 3], sizes = [32, 1], strides = [1, 1]} : vector<32x4xf32> to vector<32x1xf32>
    %24 = vector.extract_strided_slice %0 {offsets = [3, 0], sizes = [1, 128], strides = [1, 1]} : vector<4x128xf32> to vector<1x128xf32>
    %25 = vector.broadcast %23 : vector<32x1xf32> to vector<32x128xf32>
    %26 = vector.broadcast %24 : vector<1x128xf32> to vector<32x128xf32>
    %27 = arith.mulf %25, %26 : vector<32x128xf32>
    %28 = arith.addf %22, %27 : vector<32x128xf32>
    %cst = arith.constant 0.000000e+00 : f32
    %29 = vector.broadcast %cst : f32 to vector<32x128xf32>
    %30 = arith.maximumf %28, %29 : vector<32x128xf32>
    %c0_6 = arith.constant 0 : index
    %c0_7 = arith.constant 0 : index
    %31 = vector.load %arg3[%c0_6, %c0_7] : memref<8x32xf32, #tpu.memory_space<vmem>>, vector<8x32xf32>
    %cst_8 = arith.constant dense<0.000000e+00> : vector<8x128xf32>
    %32 = tpu.matmul %31, %30, %cst_8 {dimension_numbers = #tpu.dot_dimension_numbers<[1], [0], [0], [1], [0, 0, 1, 1], [], []>} : vector<8x32xf32>, vector<32x128xf32>, vector<8x128xf32> -> vector<8x128xf32>
    %33 = vector.broadcast %2 : vector<8x1xf32> to vector<8x128xf32>
    %34 = arith.addf %32, %33 : vector<8x128xf32>
    %cst_9 = arith.constant dense<0xFF800000> : vector<128xf32>
    %35 = vector.multi_reduction <maximumf>, %34, %cst_9 [0] : vector<8x128xf32> to vector<128xf32>
    %36 = vector.shape_cast %35 : vector<128xf32> to vector<1x128xf32>
    %37 = vector.broadcast %36 : vector<1x128xf32> to vector<8x128xf32>
    %38 = arith.subf %34, %37 : vector<8x128xf32>
    %39 = math.exp %38 : vector<8x128xf32>
    %cst_10 = arith.constant dense<0.000000e+00> : vector<128xf32>
    %40 = vector.multi_reduction <add>, %39, %cst_10 [0] : vector<8x128xf32> to vector<128xf32>
    %41 = vector.shape_cast %40 : vector<128xf32> to vector<1x128xf32>
    %42 = vector.broadcast %41 : vector<1x128xf32> to vector<8x128xf32>
    %43 = arith.divf %39, %42 : vector<8x128xf32>
    %c0_11 = arith.constant 0 : index
    %c0_12 = arith.constant 0 : index
    %44 = vector.load %arg5[%c0_11, %c0_12] : memref<8x128xf32, #tpu.memory_space<vmem>>, vector<8x128xf32>
    tpu.vector_store %arg5[%c0_11, %c0_12], %43 {strides = array<i32>} : memref<8x128xf32, #tpu.memory_space<vmem>>, vector<8x128xf32>,
    return
  }
  func.func @transform_0(%arg0: i32) -> (i32, i32) {
    %c0_i32 = arith.constant 0 : i32
    %c0_i32_0 = arith.constant 0 : i32
    return %c0_i32, %arg0 : i32, i32
  }
  func.func @transform_1(%arg0: i32) -> (i32, i32) {
    %c0_i32 = arith.constant 0 : i32
    %c0_i32_0 = arith.constant 0 : i32
    %c0_i32_1 = arith.constant 0 : i32
    return %c0_i32, %c0_i32_0 : i32, i32
  }
  func.func @transform_2(%arg0: i32) -> (i32, i32) {
    %c0_i32 = arith.constant 0 : i32
    %c0_i32_0 = arith.constant 0 : i32
    %c0_i32_1 = arith.constant 0 : i32
    return %c0_i32, %c0_i32_0 : i32, i32
  }
  func.func @transform_3(%arg0: i32) -> (i32, i32) {
    %c0_i32 = arith.constant 0 : i32
    %c0_i32_0 = arith.constant 0 : i32
    %c0_i32_1 = arith.constant 0 : i32
    return %c0_i32, %c0_i32_0 : i32, i32
  }
  func.func @transform_4(%arg0: i32) -> (i32, i32) {
    %c0_i32 = arith.constant 0 : i32
    %c0_i32_0 = arith.constant 0 : i32
    return %c0_i32, %arg0 : i32, i32
  }
}

</mosaic_0001>

<llo_original>
// kernel: tpu_custom_call.1
$region0: #{tpu_custom_call.1}
  #allocation0 [shape = 'u32[]', space=smem, size = 0x4, offset = 0x4, fixed_abs, tag = 'smem constant byte address 0x4 - core index']
  #allocation1 [shape = 'u32[144,128]{1,0:T(1,128)}', space=vmem, size = 0x12000, scoped, tag = 'internal scratch']
  %s0 = inlined_call_operand.vmem [shape: f32[4,128], index: 0, kind: input, shape index: {}]
  %s1 = inlined_call_operand.vmem [shape: f32[32,4], index: 1, kind: input, shape index: {}]
  %s2 = inlined_call_operand.vmem [shape: f32[8,32], index: 2, kind: input, shape index: {}]
  %s3 = inlined_call_operand.vmem [shape: f32[40,1], index: 3, kind: input, shape index: {}]
  %s4 = inlined_call_operand.hbm [shape: f32[8,128], index: 4, kind: output, shape index: {}]
  %s5 = sld [smem:[#allocation0]]
  $region26: #{tpu_custom_call.1} parent=0
    _
  %s7 = ssub.s32 1, %s5
  %s8 = scalar_select 0, %s7, %s5
  $region1: #{tpu_custom_call.1} parent=0
    #allocation2 [shape = 'u8[4096]{0}', space=vmem, size = 0x1000, scoped, tag = 'output window, operand 0, single buffered']
    #allocation3 [shape = 's32[1]{0}', space=sflag, size = 0x4, scoped, tag = 'scoped memory for tpu_custom_call.1']
    %9 = vsyncpa [#allocation3], 0
    // Predicated region
    $region2: #{tpu_custom_call.1} parent=1 // pred_check
      _
    $region3: #{tpu_custom_call.1} parent=1 // pred_check_branch
      %11 = sbr.rel (0) target = $region5
    $region4: #{tpu_custom_call.1} parent=1 // pred_region
      _
    $region5: #{tpu_custom_call.1} parent=1 // pred_fallthru
      _
    // Predicated region
    $region6: #{tpu_custom_call.1} parent=1 // pred_check
      _
    $region7: #{tpu_custom_call.1} parent=1 // pred_check_branch
      %13 = sbr.rel (0) target = $region9
    $region8: #{tpu_custom_call.1} parent=1 // pred_region
      _
    $region9: #{tpu_custom_call.1} parent=1 // pred_fallthru
      _
    // Predicated region
    $region10: #{tpu_custom_call.1} parent=1 // pred_check
      _
    $region11: #{tpu_custom_call.1} parent=1 // pred_check_branch
      %15 = sbr.rel (0) target = $region13
    $region12: #{tpu_custom_call.1} parent=1 // pred_region
      _
    $region13: #{tpu_custom_call.1} parent=1 // pred_fallthru
      _
    // Predicated region
    $region14: #{tpu_custom_call.1} parent=1 // pred_check
      _
    $region15: #{tpu_custom_call.1} parent=1 // pred_check_branch
      %17 = sbr.rel (0) target = $region17
    $region16: #{tpu_custom_call.1} parent=1 // pred_region
      _
    $region17: #{tpu_custom_call.1} parent=1 // pred_fallthru
      _
    %v18 = vld [vmem:[%s0] sm:$0xf]
    %v19 = vld [vmem:[%s3] sm:$0xff]
    %v20 = vld [vmem:[%s3 + $0x8] sm:$0xff]
    %v21 = vld [vmem:[%s3 + $0x10] sm:$0xff]
    %v22 = vld [vmem:[%s3 + $0x18] sm:$0xff]
    %v23 = vld [vmem:[%s3 + $0x20] sm:$0xff]
    %v24 = vld [vmem:[%s1] sm:$0xff]
    %v25 = vld [vmem:[%s1 + $0x8] sm:$0xff]
    %v26 = vld [vmem:[%s1 + $0x10] sm:$0xff]
    %v27 = vld [vmem:[%s1 + $0x18] sm:$0xff]
    %29 = vset.pattern.permute.xlu0 0
    %30 = vperm.xlu0 %29, %v24
    %v31 = vpop.permute.xlu0 %30
    %34 = vset.pattern.permute.xlu0 0
    %35 = vperm.xlu0 %34, %v25
    %v36 = vpop.permute.xlu0 %35
    %39 = vset.pattern.permute.xlu0 0
    %40 = vperm.xlu0 %39, %v26
    %v41 = vpop.permute.xlu0 %40
    %44 = vset.pattern.permute.xlu0 0
    %45 = vperm.xlu0 %44, %v27
    %v46 = vpop.permute.xlu0 %45
    %v48 = vlaneseq
    %v49 = vshrl.u32 %v48, 7
    %v50 = vsub.s32 0, %v49
    %v51 = vrot.slane %v18, %v50
    %v52 = vmul.f32 %v31, %v51
    %v53 = vmul.f32 %v36, %v51
    %v54 = vmul.f32 %v41, %v51
    %v55 = vmul.f32 %v46, %v51
    %57 = vset.pattern.permute.xlu0 0
    %58 = vperm.xlu0 %57, %v19
    %v59 = vpop.permute.xlu0 %58
    %62 = vset.pattern.permute.xlu0 0
    %63 = vperm.xlu0 %62, %v20
    %v64 = vpop.permute.xlu0 %63
    %67 = vset.pattern.permute.xlu0 0
    %68 = vperm.xlu0 %67, %v21
    %v69 = vpop.permute.xlu0 %68
    %72 = vset.pattern.permute.xlu0 0
    %73 = vperm.xlu0 %72, %v22
    %v74 = vpop.permute.xlu0 %73
    %v76 = vadd.f32 %v52, %v59
    %v77 = vadd.f32 %v53, %v64
    %v78 = vadd.f32 %v54, %v69
    %v79 = vadd.f32 %v55, %v74
    %80 = vset.pattern.permute.xlu0 1
    %81 = vperm.xlu0 %80, %v24
    %v82 = vpop.permute.xlu0 %81
    %84 = vset.pattern.permute.xlu0 1
    %85 = vperm.xlu0 %84, %v25
    %v86 = vpop.permute.xlu0 %85
    %88 = vset.pattern.permute.xlu0 1
    %89 = vperm.xlu0 %88, %v26
    %v90 = vpop.permute.xlu0 %89
    %92 = vset.pattern.permute.xlu0 1
    %93 = vperm.xlu0 %92, %v27
    %v94 = vpop.permute.xlu0 %93
    %v96 = vlaneseq
    %v97 = vshrl.u32 %v96, 7
    %v98 = vsub.s32 1, %v97
    %v99 = vrot.slane %v18, %v98
    %v100 = vmul.f32 %v82, %v99
    %v101 = vmul.f32 %v86, %v99
    %v102 = vmul.f32 %v90, %v99
    %v103 = vmul.f32 %v94, %v99
    %v104 = vadd.f32 %v76, %v100
    %v105 = vadd.f32 %v77, %v101
    %v106 = vadd.f32 %v78, %v102
    %v107 = vadd.f32 %v79, %v103
    %108 = vset.pattern.permute.xlu0 2
    %109 = vperm.xlu0 %108, %v24
    %v110 = vpop.permute.xlu0 %109
    %112 = vset.pattern.permute.xlu0 2
    %113 = vperm.xlu0 %112, %v25
    %v114 = vpop.permute.xlu0 %113
    %116 = vset.pattern.permute.xlu0 2
    %117 = vperm.xlu0 %116, %v26
    %v118 = vpop.permute.xlu0 %117
    %120 = vset.pattern.permute.xlu0 2
    %121 = vperm.xlu0 %120, %v27
    %v122 = vpop.permute.xlu0 %121
    %v124 = vlaneseq
    %v125 = vshrl.u32 %v124, 7
    %v126 = vsub.s32 2, %v125
    %v127 = vrot.slane %v18, %v126
    %v128 = vmul.f32 %v110, %v127
    %v129 = vmul.f32 %v114, %v127
    %v130 = vmul.f32 %v118, %v127
    %v131 = vmul.f32 %v122, %v127
    %v132 = vadd.f32 %v104, %v128
    %v133 = vadd.f32 %v105, %v129
    %v134 = vadd.f32 %v106, %v130
    %v135 = vadd.f32 %v107, %v131
    %136 = vset.pattern.permute.xlu0 3
    %137 = vperm.xlu0 %136, %v24
    %v138 = vpop.permute.xlu0 %137
    %140 = vset.pattern.permute.xlu0 3
    %141 = vperm.xlu0 %140, %v25
    %v142 = vpop.permute.xlu0 %141
    %144 = vset.pattern.permute.xlu0 3
    %145 = vperm.xlu0 %144, %v26
    %v146 = vpop.permute.xlu0 %145
    %148 = vset.pattern.permute.xlu0 3
    %149 = vperm.xlu0 %148, %v27
    %v150 = vpop.permute.xlu0 %149
    %v152 = vlaneseq
    %v153 = vshrl.u32 %v152, 7
    %v154 = vsub.s32 3, %v153
    %v155 = vrot.slane %v18, %v154
    %v156 = vmul.f32 %v138, %v155
    %v157 = vmul.f32 %v142, %v155
    %v158 = vmul.f32 %v146, %v155
    %v159 = vmul.f32 %v150, %v155
    %v160 = vadd.f32 %v132, %v156
    %v161 = vadd.f32 %v133, %v157
    %v162 = vadd.f32 %v134, %v158
    %v163 = vadd.f32 %v135, %v159
    %v164 = vmax.f32 %v160, 0.0
    %v165 = vmax.f32 %v161, 0.0
    %v166 = vmax.f32 %v162, 0.0
    %v167 = vmax.f32 %v163, 0.0
    %v168 = vld [vmem:[%s2] sm:$0xff]
    %170 = vset.pattern.permute.xlu0 0
    %171 = vperm.xlu0 %170, %v23
    %v172 = vpop.permute.xlu0 %171
    %vm174 = vcmask 261120
    %v176 = vsel %vm174, %v168, 0
    %178 = vmatprep.subr.mxu0 0.0
    %179 = vmatpush1.msra.mxu0 0.0
    %180 = vmatprep.subr.mxu0 0.0
    %181 = vmatpush1.msra.mxu0 0.0
    %182 = vmatprep.subr.mxu0 0.0
    %183 = vmatpush1.msra.mxu0 0.0
    %184 = vmatprep.subr.mxu0 0.0
    %185 = vmatpush1.msra.mxu0 0.0
    %186 = vmatprep.subr.mxu0 0.0
    %187 = vmatpush1.msra.mxu0 0.0
    %188 = vmatprep.subr.mxu0 0.0
    %189 = vmatpush1.msra.mxu0 0.0
    %190 = vmatprep.subr.mxu0 0.0
    %191 = vmatpush1.msra.mxu0 0.0
    %192 = vmatprep.subr.mxu0 0.0
    %193 = vmatpush1.msra.mxu0 0.0
    %194 = vmatprep.subr.mxu0 0.0
    %195 = vmatpush1.msra.mxu0 0.0
    %196 = vmatprep.subr.mxu0 0.0
    %197 = vmatpush1.msra.mxu0 0.0
    %198 = vmatprep.subr.mxu0 0.0
    %199 = vmatpush1.msra.mxu0 0.0
    %200 = vmatprep.subr.mxu0 0.0
    %201 = vmatpush1.msra.mxu0 0.0
    %202 = vmatprep.subr.mxu0 0.0
    %203 = vmatpush1.msra.mxu0 %v167
    %204 = vmatprep.subr.mxu0 0.0
    %205 = vmatpush1.msra.mxu0 %v166
    %206 = vmatprep.subr.mxu0 0.0
    %207 = vmatpush1.msra.mxu0 %v165
    %208 = vmatprep.subr.mxu0 0.0
    %209 = vmatpush1.msra.mxu0 %v164
    %210 = vmatprep.subr.mxu0 0.0
    %211 = vmatpush2.msra.mxu0 0.0
    %212 = vmatprep.subr.mxu0 0.0
    %213 = vmatpush2.msra.mxu0 0.0
    %214 = vmatprep.subr.mxu0 0.0
    %215 = vmatpush2.msra.mxu0 0.0
    %216 = vmatprep.subr.mxu0 0.0
    %217 = vmatpush2.msra.mxu0 0.0
    %218 = vmatprep.subr.mxu0 0.0
    %219 = vmatpush2.msra.mxu0 0.0
    %220 = vmatprep.subr.mxu0 0.0
    %221 = vmatpush2.msra.mxu0 0.0
    %222 = vmatprep.subr.mxu0 0.0
    %223 = vmatpush2.msra.mxu0 0.0
    %224 = vmatprep.subr.mxu0 0.0
    %225 = vmatpush2.msra.mxu0 0.0
    %226 = vmatprep.subr.mxu0 0.0
    %227 = vmatpush2.msra.mxu0 0.0
    %228 = vmatprep.subr.mxu0 0.0
    %229 = vmatpush2.msra.mxu0 0.0
    %230 = vmatprep.subr.mxu0 0.0
    %231 = vmatpush2.msra.mxu0 0.0
    %232 = vmatprep.subr.mxu0 0.0
    %233 = vmatpush2.msra.mxu0 0.0
    %234 = vmatprep.subr.mxu0 0.0
    %235 = vmatpush2.msra.mxu0 0.0
    %236 = vmatprep.subr.mxu0 0.0
    %237 = vmatpush2.msra.mxu0 0.0
    %238 = vmatprep.subr.mxu0 0.0
    %239 = vmatpush2.msra.mxu0 0.0
    %240 = vmatprep.subr.mxu0 0.0
    %241 = vmatpush2.msra.mxu0 0.0
    %242 = vmatprep.mubr.f32.mxu0 0.0
    %243 = vmatmul.mubr.f32.gmra.mxu0 %v176
    %v244 = vpop.f32.mrf.mxu0
    %v245 = vadd.f32 %v172, %v244
    %v246 = vpop.f32.mrf.mxu0
    %247 = vdwg.mxu0
    %v248 = vrot.slane %v245, 4
    %v249 = vmax.f32 %v245, %v248
    %v250 = vrot.slane %v249, 2
    %v251 = vmax.f32 %v249, %v250
    %v252 = vrot.slane %v251, 1
    %v253 = vmax.f32 %v251, %v252
    %v254 = vsub.f32 %v245, %v253
    %v255 = vmul.f32 %v254, 1.442695
    %v256 = vpow.pop %v255
    %v257 = vrot.slane %v256, 4
    %v258 = vadd.f32 %v256, %v257
    %v259 = vrot.slane %v258, 2
    %v260 = vadd.f32 %v258, %v259
    %v261 = vrot.slane %v260, 1
    %v262 = vadd.f32 %v260, %v261
    %v263 = vrcp.pop %v262
    %v264 = vmul.f32 %v256, %v263
    %265 = vst [vmem:[#allocation2] sm:$0xff] %v264
    // Predicated region
    $region18: #{tpu_custom_call.1} parent=1 // pred_check
      _
    $region19: #{tpu_custom_call.1} parent=1 // pred_check_branch
      %267 = sbr.rel (0) target = $region21
    $region20: #{tpu_custom_call.1} parent=1 // pred_region
      %s269 = ssub.s32 128, 128
      %270 = vsyncadd [#allocation3], %s269
      %s272 = sshll.u32 [#allocation2], 4
      %s273 = int_to_ptr.vmem [resolvable:$true] %s272
      %275 = dma.vmem_to_hbm [thread:$0]  %s273, 128, %s4, [#allocation3]
    $region21: #{tpu_custom_call.1} parent=1 // pred_fallthru
      _
    // Predicated region
    $region22: #{tpu_custom_call.1} parent=1 // pred_check
      _
    $region23: #{tpu_custom_call.1} parent=1 // pred_check_branch
      %277 = sbr.rel (0) target = $region25
    $region24: #{tpu_custom_call.1} parent=1 // pred_region
      %278 = dma.done [#allocation3], 128
    $region25: #{tpu_custom_call.1} parent=1 // pred_fallthru
      _
    %279 = vsyncpa [#allocation3], 1

</llo_original>
